<compile_context>
chip_gen: v5e
topology: v5e:2x2
jax: 0.10.0
libtpu: 0.0.40
codegen_flags: <defaults>
</compile_context>

<pallas_src>
import numpy as np
import jax
import jax.numpy as jnp
from jax.experimental import pallas as pl
from jax.experimental.pallas import tpu as pltpu


def _gemm_bias_kernel(p_ref, w_ref, b_ref, o_ref):
    # p_ref: (1, K, TC)    bf16 im2col columns for this (sample, column-tile)
    # w_ref: (Cout, K)     bf16 flattened weight, (kh, kw, cin) row order
    # b_ref: (Cout, 1)     f32 bias
    # o_ref: (1, Cout, TC) f32 output block (lane-dense last dim)
    acc = jnp.dot(w_ref[...], p_ref[0],
                  preferred_element_type=jnp.float32)          # (Cout, TC), one MXU pass
    o_ref[0] = (acc + b_ref[...]).astype(o_ref.dtype)          # single f32 bias add


def _vmem_capacity_bytes() -> int:
    """Device VMEM capacity (64 MiB on v7x, 128 MiB on v5e/v6e); conservative fallback."""
    try:
        return int(pltpu.get_tpu_info().vmem_capacity_bytes)
    except Exception:
        return 64 << 20


def _choose_col_tile(cols, K, Cout, n_batch):
    """Largest lane-dense (multiple-of-128) column tile that fits a conservative,
    device-derived VMEM budget; halved further (if possible) so the grid has >= 2
    steps -> DMA/compute overlap and work for both v7x TensorCores at small batch."""
    if cols % 128 != 0:
        return cols                         # full-dim block (allowed by the (8,128) rule)
    budget = _vmem_capacity_bytes() // 8    # headroom for double-buffering / scoped default

    def block_bytes(tc):
        # double-buffered bf16 pmat block + f32 out block, plus resident weight/bias
        return 2 * (2 * K * tc + 4 * Cout * tc) + 2 * Cout * K + 4 * Cout

    tile = cols
    while tile % 256 == 0 and block_bytes(tile) > budget:
        tile //= 2
    while tile % 256 == 0 and n_batch * (cols // tile) < 2:
        tile //= 2
    return tile


def spectral_conv2d(x_nchw, weight_oihw, bias, stride=1, padding=0):
    """Forward pass of SpectralConv2d: conv2d(x, weight, bias, stride, padding)."""
    N, Cin, H, W = x_nchw.shape
    Cout, Cin_w, KH, KW = weight_oihw.shape
    assert Cin == Cin_w
    S, P = int(stride), int(padding)
    Ho = (H + 2 * P - KH) // S + 1
    Wo = (W + 2 * P - KW) // S + 1
    K = KH * KW * Cin
    cols = Ho * Wo

    # ---- wrapper-side im2col (pure XLA, bf16) --------------------------------
    # Static strided slices per (kh, kw) tap; row order (kh, kw, cin) matches the
    # weight flattening below.  Extra HBM traffic (~KH*KW x input) is trivially
    # hidden by the BlockSpec pipeline.
    x_pad = jnp.pad(x_nchw, ((0, 0), (0, 0), (P, P), (P, P))).astype(jnp.bfloat16)
    taps = []
    for kh in range(KH):
        for kw in range(KW):
            taps.append(jax.lax.slice(
                x_pad,
                (0, 0, kh, kw),
                (N, Cin, kh + (Ho - 1) * S + 1, kw + (Wo - 1) * S + 1),
                (1, 1, S, S)))                                  # (N, Cin, Ho, Wo)
    pmat = jnp.stack(taps, axis=1).reshape(N, K, cols)          # (N, K, Ho*Wo) bf16

    # Weight flattened to (Cout, K) in (kh, kw, cin) order, cast once to bf16
    # -> single-pass MXU matmul with f32 accumulation.
    w2 = (jnp.transpose(weight_oihw, (0, 2, 3, 1))
          .reshape(Cout, K).astype(jnp.bfloat16))
    b2 = bias.reshape(Cout, 1).astype(jnp.float32)

    # ---- lane-dense column-tiled GEMM + bias ---------------------------------
    TC = _choose_col_tile(cols, K, Cout, N)
    assert cols % TC == 0
    grid = (N, cols // TC)

    out_flat = pl.pallas_call(
        _gemm_bias_kernel,
        out_shape=jax.ShapeDtypeStruct((N, Cout, cols), x_nchw.dtype),
        grid_spec=pltpu.PrefetchScalarGridSpec(
            num_scalar_prefetch=0,
            grid=grid,
            in_specs=[
                pl.BlockSpec((1, K, TC), lambda n, c: (n, 0, c)),
                pl.BlockSpec((Cout, K), lambda n, c: (0, 0)),
                pl.BlockSpec((Cout, 1), lambda n, c: (0, 0)),
            ],
            out_specs=pl.BlockSpec((1, Cout, TC), lambda n, c: (n, 0, c)),
        ),
        compiler_params=pltpu.CompilerParams(
            # Each grid point writes a distinct output block -> both axes parallel
            # (lets the runtime shard across v7x's two TensorCores).
            dimension_semantics=("parallel", "parallel"),
        ),
    )(pmat, w2, b2)

    # (N, Cout, Ho*Wo) -> (N, Cout, Ho, Wo): contiguous reshape, no transpose.
    return out_flat.reshape(N, Cout, Ho, Wo)


def init_spectral_weights(out_channels, in_channels, kernel_size, seed=0):
    """Deterministic replica of the PyTorch __init__: |FFT2(rand)| weights, zero bias.
    (Init-time, host-side numpy — not part of the forward kernel.)"""
    rng = np.random.default_rng(seed)
    real_init = rng.random((out_channels, in_channels, kernel_size, kernel_size))
    real_fft = np.abs(np.fft.fft2(real_init)).astype(np.float32)
    return jnp.asarray(real_fft), jnp.zeros((out_channels,), jnp.float32)


if __name__ == "__main__":
    # Small shapes consistent with the module: N=2, Cin=4, Cout=8, 16x16 spatial,
    # kernel_size=3, stride=1, padding=1.
    N, Cin, Cout, H, W, Kk, S, P = 2, 4, 8, 16, 16, 3, 1, 1

    key = jax.random.PRNGKey(0)
    x = jax.random.normal(key, (N, Cin, H, W), dtype=jnp.float32)
    weight, bias = init_spectral_weights(Cout, Cin, Kk, seed=0)

    out = spectral_conv2d(x, weight, bias, stride=S, padding=P)
    out = jax.block_until_ready(out)

    # Reference: XLA conv2d on the SAME bf16-rounded operands the kernel's MXU pass
    # uses (bf16 multiplies, f32 accumulation), so the comparison isolates the conv
    # math rather than operand quantization.
    xq = x.astype(jnp.bfloat16).astype(jnp.float32)
    wq = weight.astype(jnp.bfloat16).astype(jnp.float32)
    ref = jax.lax.conv_general_dilated(
        xq, wq, (S, S), [(P, P), (P, P)],
        dimension_numbers=("NCHW", "OIHW", "NCHW"),
        precision=jax.lax.Precision.HIGHEST,
    ) + bias.reshape(1, Cout, 1, 1)
    ref = jax.block_until_ready(ref)

    assert out.shape == (N, Cout, H, W)
    np.testing.assert_allclose(np.asarray(out), np.asarray(ref), rtol=1e-3, atol=1e-3)
    print("KERNEL_OK")
</pallas_src>

<mosaic_0001>
module attributes {stable_mosaic.version = 11 : i64} {
  func.func @_gemm_bias_kernel(%arg0: i32, %arg1: i32, %arg2: memref<1x36x256xbf16, #tpu.memory_space<vmem>>, %arg3: memref<8x36xbf16, #tpu.memory_space<vmem>>, %arg4: memref<8x1xf32, #tpu.memory_space<vmem>>, %arg5: memref<1x8x256xf32, #tpu.memory_space<vmem>>) attributes {dimension_semantics = [#tpu.dimension_semantics<parallel>, #tpu.dimension_semantics<parallel>], iteration_bounds = array<i64: 2, 1>, scalar_prefetch = 0 : i64, scratch_operands = 0 : i64, tpu.core_type = #tpu.core_type<tc>, window_params = [{transform_indices = @transform_0, window_bounds = array<i64: 1, 36, 256>}, {pipeline_mode = #tpu.pipeline_mode<synchronous>, transform_indices = @transform_1, window_bounds = array<i64: 8, 36>}, {pipeline_mode = #tpu.pipeline_mode<synchronous>, transform_indices = @transform_2, window_bounds = array<i64: 8, 1>}, {transform_indices = @transform_3, window_bounds = array<i64: 1, 8, 256>}]} {
    %c0 = arith.constant 0 : index
    %c0_0 = arith.constant 0 : index
    %0 = vector.load %arg3[%c0, %c0_0] : memref<8x36xbf16, #tpu.memory_space<vmem>>, vector<8x36xbf16>
    %c0_1 = arith.constant 0 : index
    %c0_2 = arith.constant 0 : index
    %c0_3 = arith.constant 0 : index
    %1 = vector.load %arg2[%c0_1, %c0_2, %c0_3] : memref<1x36x256xbf16, #tpu.memory_space<vmem>>, vector<1x36x256xbf16>
    %2 = vector.shape_cast %1 : vector<1x36x256xbf16> to vector<36x256xbf16>
    %cst = arith.constant dense<0.000000e+00> : vector<8x256xf32>
    %3 = tpu.matmul %0, %2, %cst {dimension_numbers = #tpu.dot_dimension_numbers<[1], [0], [0], [1], [0, 0, 1, 1], [], []>} : vector<8x36xbf16>, vector<36x256xbf16>, vector<8x256xf32> -> vector<8x256xf32>
    %c0_4 = arith.constant 0 : index
    %c0_5 = arith.constant 0 : index
    %4 = vector.load %arg4[%c0_4, %c0_5] : memref<8x1xf32, #tpu.memory_space<vmem>>, vector<8x1xf32>
    %5 = vector.broadcast %4 : vector<8x1xf32> to vector<8x256xf32>
    %6 = arith.addf %3, %5 : vector<8x256xf32>
    %c0_6 = arith.constant 0 : index
    %c0_7 = arith.constant 0 : index
    %c0_8 = arith.constant 0 : index
    %7 = vector.load %arg5[%c0_6, %c0_7, %c0_8] : memref<1x8x256xf32, #tpu.memory_space<vmem>>, vector<1x8x256xf32>
    %8 = vector.shape_cast %7 : vector<1x8x256xf32> to vector<8x256xf32>
    %9 = vector.shape_cast %6 : vector<8x256xf32> to vector<1x8x256xf32>
    tpu.vector_store %arg5[%c0_6, %c0_7, %c0_8], %9 {strides = array<i32>} : memref<1x8x256xf32, #tpu.memory_space<vmem>>, vector<1x8x256xf32>,
    return
  }
  func.func @transform_0(%arg0: i32, %arg1: i32) -> (i32, i32, i32) {
    %c0_i32 = arith.constant 0 : i32
    %c0_i32_0 = arith.constant 0 : i32
    return %arg0, %c0_i32, %arg1 : i32, i32, i32
  }
  func.func @transform_1(%arg0: i32, %arg1: i32) -> (i32, i32) {
    %c0_i32 = arith.constant 0 : i32
    %c0_i32_0 = arith.constant 0 : i32
    %c0_i32_1 = arith.constant 0 : i32
    return %c0_i32, %c0_i32_0 : i32, i32
  }
  func.func @transform_2(%arg0: i32, %arg1: i32) -> (i32, i32) {
    %c0_i32 = arith.constant 0 : i32
    %c0_i32_0 = arith.constant 0 : i32
    %c0_i32_1 = arith.constant 0 : i32
    return %c0_i32, %c0_i32_0 : i32, i32
  }
  func.func @transform_3(%arg0: i32, %arg1: i32) -> (i32, i32, i32) {
    %c0_i32 = arith.constant 0 : i32
    %c0_i32_0 = arith.constant 0 : i32
    return %arg0, %c0_i32, %arg1 : i32, i32, i32
  }
}

</mosaic_0001>

<llo_original>
// kernel: tpu_custom_call.1
$region0: #{tpu_custom_call.1}
  #allocation0 [shape = 'u32[]', space=smem, size = 0x4, offset = 0x4, fixed_abs, tag = 'smem constant byte address 0x4 - core index']
  #allocation1 [shape = 'u32[72,128]{1,0:T(1,128)}', space=vmem, size = 0x9000, scoped, tag = 'internal scratch']
  %s0 = inlined_call_operand.vmem [shape: bf16[2,36,256], index: 0, kind: input, shape index: {}]
  %s1 = inlined_call_operand.vmem [shape: bf16[8,36], index: 1, kind: input, shape index: {}]
  %s2 = inlined_call_operand.vmem [shape: f32[8,1], index: 2, kind: input, shape index: {}]
  %s3 = inlined_call_operand.hbm [shape: f32[2,8,256], index: 3, kind: output, shape index: {}]
  %s4 = sld [smem:[#allocation0]]
  $region45: #{tpu_custom_call.1} parent=0
    _
  %s6 = ssub.s32 1, %s4
  %s7 = scalar_select 0, %s6, %s4
  $region1: #{tpu_custom_call.1} parent=0
    #allocation2 [shape = 'u8[16384]{0}', space=vmem, size = 0x4000, scoped, tag = 'output window, operand 0']
    #allocation3 [shape = 's32[2]{0}', space=sflag, size = 0x8, scoped, tag = 'scoped memory for tpu_custom_call.1']
    %8 = vsyncpa [#allocation3], 0
    %s9 = scalar_lea.sflag [#allocation3], 1
    %10 = vsyncpa %s9, 0
    loop: start=0, step=1, limit=4
    $region2: #{tpu_custom_call.1} parent=1 // loop_pre_header
      _
    $region3: #{tpu_custom_call.1} parent=1 // loop_header
      %s12 = sphi 0, %s16
      %p13 = scmp.ge.s32.totalorder %s12, 4
      %s19 = sphi 0, %s31
      %s20 = sphi 0, %s27
      %s21 = sphi 0, %s19
      %s22 = sphi 0, %s20
      %s23 = sphi 0, %s21
      %s24 = sphi 0, %s22
      %s36 = sphi 0, %s38
      %s39 = sphi 0, %s36
      %s40 = sphi 0, %s39
      %s56 = sphi 0, %s40
      %s60 = sphi 0, %s60
      %s62 = sphi 0, %s60
      %s63 = sphi 0, %s62
      %s77 = sphi 0, %s63
      %s81 = sphi 0, %s81
      %s83 = sphi 0, %s81
      %s84 = sphi 0, %s83
      %s98 = sphi 0, %s84
      %s106 = sphi 0, %s108
      %s109 = sphi 0, %s106
      %s110 = sphi 0, %s109
      %s126 = sphi 0, %s110
    $region4: #{tpu_custom_call.1} parent=1 // loop_header_branch
      %15 = sbr.rel (%p13) target = $region8
    $region5: #{tpu_custom_call.1} parent=1 // loop_body
      %s17 = ssub.s32 %s12, 1
      %s18 = ssub.s32 %s12, 2
      %s25 = sadd.s32 1, %s20
      %p26 = scmp.ge.s32.totalorder %s25, 1
      %s27 = scalar_select %p26, 0, %s25
      %s28 = sadd.s32 1, %s19
      %s29 = scalar_select %p26, %s28, %s19
      %p30 = scmp.ge.s32.totalorder %s29, 2
      %s31 = scalar_select %p30, 0, %s29
      %s32 = ssub.s32 %s19, %s31
      %s33 = ssub.s32 %s20, %s27
      %s34 = sor.u32 %s32, %s33
      %p35 = scmp.eq.s32.totalorder %s34, 0
      %s37 = sadd.s32 %s36, 1
      %s38 = scalar_select %p35, %s36, %s37
      %p41 = pneg %p35
      %p42 = scmp.eq.s32.totalorder %s12, 1
      %p43 = por %p41, %p42
      %p44 = scmp.ne.s32.totalorder %s36, %s39
      %p45 = scmp.eq.s32.totalorder %s12, 0
      %p46 = por %p44, %p45
      %p47 = scmp.ne.s32.totalorder %s36, %s39
      %p48 = scmp.eq.s32.totalorder %s17, 1
      %p49 = por %p47, %p48
      %p50 = scmp.ne.s32.totalorder %s39, %s40
      %p51 = scmp.eq.s32.totalorder %s17, 0
      %p52 = por %p50, %p51
      %p53 = scmp.ne.s32.totalorder %s39, %s40
      %p54 = scmp.eq.s32.totalorder %s18, 1
      %p55 = por %p53, %p54
      %p57 = scmp.ne.s32.totalorder %s40, %s56
      %p58 = scmp.eq.s32.totalorder %s18, 0
      %p59 = por %p57, %p58
      %s61 = sadd.s32 %s60, 1
      %p64 = scmp.eq.s32.totalorder %s12, 1
      %p65 = scmp.ne.s32.totalorder %s60, %s62
      %p66 = scmp.eq.s32.totalorder %s12, 0
      %p67 = por %p65, %p66
      %p68 = scmp.ne.s32.totalorder %s60, %s62
      %p69 = scmp.eq.s32.totalorder %s17, 1
      %p70 = por %p68, %p69
      %p71 = scmp.ne.s32.totalorder %s62, %s63
      %p72 = scmp.eq.s32.totalorder %s17, 0
      %p73 = por %p71, %p72
      %p74 = scmp.ne.s32.totalorder %s62, %s63
      %p75 = scmp.eq.s32.totalorder %s18, 1
      %p76 = por %p74, %p75
      %p78 = scmp.ne.s32.totalorder %s63, %s77
      %p79 = scmp.eq.s32.totalorder %s18, 0
      %p80 = por %p78, %p79
      %s82 = sadd.s32 %s81, 1
      %p85 = scmp.eq.s32.totalorder %s12, 1
      %p86 = scmp.ne.s32.totalorder %s81, %s83
      %p87 = scmp.eq.s32.totalorder %s12, 0
      %p88 = por %p86, %p87
      %p89 = scmp.ne.s32.totalorder %s81, %s83
      %p90 = scmp.eq.s32.totalorder %s17, 1
      %p91 = por %p89, %p90
      %p92 = scmp.ne.s32.totalorder %s83, %s84
      %p93 = scmp.eq.s32.totalorder %s17, 0
      %p94 = por %p92, %p93
      %p95 = scmp.ne.s32.totalorder %s83, %s84
      %p96 = scmp.eq.s32.totalorder %s18, 1
      %p97 = por %p95, %p96
      %p99 = scmp.ne.s32.totalorder %s84, %s98
      %p100 = scmp.eq.s32.totalorder %s18, 0
      %p101 = por %p99, %p100
      %s102 = ssub.s32 %s19, %s31
      %s103 = ssub.s32 %s20, %s27
      %s104 = sor.u32 %s102, %s103
      %p105 = scmp.eq.s32.totalorder %s104, 0
      %s107 = sadd.s32 %s106, 1
      %s108 = scalar_select %p105, %s106, %s107
      %p111 = pneg %p105
      %p112 = scmp.eq.s32.totalorder %s12, 1
      %p113 = por %p111, %p112
      %p114 = scmp.ne.s32.totalorder %s106, %s109
      %p115 = scmp.eq.s32.totalorder %s12, 0
      %p116 = por %p114, %p115
      %p117 = scmp.ne.s32.totalorder %s106, %s109
      %p118 = scmp.eq.s32.totalorder %s17, 1
      %p119 = por %p117, %p118
      %p120 = scmp.ne.s32.totalorder %s109, %s110
      %p121 = scmp.eq.s32.totalorder %s17, 0
      %p122 = por %p120, %p121
      %p123 = scmp.ne.s32.totalorder %s109, %s110
      %p124 = scmp.eq.s32.totalorder %s18, 1
      %p125 = por %p123, %p124
      %p127 = scmp.ne.s32.totalorder %s110, %s126
      %p128 = scmp.eq.s32.totalorder %s18, 0
      %p129 = por %p127, %p128
      %p130 = scmp.le.s32.totalorder 1, %s12
      %p131 = scmp.lt.s32.totalorder %s12, 3
      %p132 = pnand %p130, %p131
      %p133 = pneg %p132
      // Predicated region
      $region9: #{tpu_custom_call.1} parent=5 // pred_check
        _
      $region10: #{tpu_custom_call.1} parent=5 // pred_check_branch
        %135 = sbr.rel (%p132) target = $region12
      $region11: #{tpu_custom_call.1} parent=5 // pred_region
        %s136 = ssub.s32 %s12, 1
        // Predicated region
        $region13: #{tpu_custom_call.1} parent=11 // pred_check
          %p137 = pneg %p73
        $region14: #{tpu_custom_call.1} parent=11 // pred_check_branch
          %139 = sbr.rel (%p137) target = $region16
        $region15: #{tpu_custom_call.1} parent=11 // pred_region
          _
        $region16: #{tpu_custom_call.1} parent=11 // pred_fallthru
          _
        // Predicated region
        $region17: #{tpu_custom_call.1} parent=11 // pred_check
          %p140 = pneg %p94
        $region18: #{tpu_custom_call.1} parent=11 // pred_check_branch
          %142 = sbr.rel (%p140) target = $region20
        $region19: #{tpu_custom_call.1} parent=11 // pred_region
          _
        $region20: #{tpu_custom_call.1} parent=11 // pred_fallthru
          _
      $region12: #{tpu_custom_call.1} parent=5 // pred_fallthru
        _
      %p143 = scmp.lt.s32.totalorder %s12, 2
      // Predicated region
      $region21: #{tpu_custom_call.1} parent=5 // pred_check
        %p144 = pneg %p143
      $region22: #{tpu_custom_call.1} parent=5 // pred_check_branch
        %146 = sbr.rel (%p144) target = $region24
      $region23: #{tpu_custom_call.1} parent=5 // pred_region
        // Predicated region
        $region25: #{tpu_custom_call.1} parent=23 // pred_check
          %p147 = pneg %p46
        $region26: #{tpu_custom_call.1} parent=23 // pred_check_branch
          %149 = sbr.rel (%p147) target = $region28
        $region27: #{tpu_custom_call.1} parent=23 // pred_region
          %s150 = smul.u32 2, %s20
          %p151 = scmp.lt.s32.totalorder %s19, 1
          %s152 = scalar_select %p151, %s19, 1
          %p153 = scmp.lt.s32.totalorder %s150, 1
          %s154 = scalar_select %p153, %s150, 1
          %s155 = smul.addr %s152, 10
          %s156 = sadd.s32 %s154, %s155
          %s157 = smul.addr %s156, 4
          %s158 = scalar_lea.vmem %s0, %s157
          %s159 = smul.u32 2, %s20
        $region28: #{tpu_custom_call.1} parent=23 // pred_fallthru
          _
      $region24: #{tpu_custom_call.1} parent=5 // pred_fallthru
        _
      %p160 = scmp.le.s32.totalorder 1, %s12
      %p161 = scmp.lt.s32.totalorder %s12, 3
      %p162 = pnand %p160, %p161
      %p163 = pneg %p162
      // Predicated region
      $region29: #{tpu_custom_call.1} parent=5 // pred_check
        _
      $region30: #{tpu_custom_call.1} parent=5 // pred_check_branch
        %165 = sbr.rel (%p162) target = $region32
      $region31: #{tpu_custom_call.1} parent=5 // pred_region
        %s166 = ssub.s32 %s12, 1
        %s167 = smul.u32 2, %s22
        %p168 = scmp.lt.s32.totalorder %s21, 1
        %s169 = scalar_select %p168, %s21, 1
        %p170 = scmp.lt.s32.totalorder %s167, 1
        %s171 = scalar_select %p170, %s167, 1
        %s172 = smul.addr %s169, 10
        %s173 = sadd.s32 %s171, %s172
        %s174 = smul.addr %s173, 4
        %s175 = scalar_lea.vmem %s0, %s174
        %p176 = pneg %p52
        %p177 = pneg %p49
        %p178 = pneg %p73
        %p179 = pneg %p70
        %p180 = pneg %p94
        %p181 = pneg %p91
        %p182 = pneg %p122
        %p183 = pneg %p119
        %s184 = sand.u32 %s109, 1
        %s185 = scalar_lea.sflag [#allocation3], %s184
        %s186 = sand.u32 %s109, 1
        %s187 = smul.addr %s186, 16
        %s188 = scalar_lea.vmem [#allocation2], %s187
        %s189 = smul.u32 2, %s22
        %p190 = scmp.lt.s32.totalorder %s21, 1
        %s191 = scalar_select %p190, %s21, 1
        %p192 = scmp.lt.s32.totalorder %s189, 1
        %s193 = scalar_select %p192, %s189, 1
        %s194 = smul.addr %s191, 10
        %s195 = sadd.s32 %s193, %s194
        %s196 = smul.addr %s195, 4
        %s197 = scalar_lea.vmem %s0, %s196
        %s198 = smul.u32 2, %s22
        %s199 = smul.u32 2, %s22
        %v201 = vld [vmem:[%s1] sm:$0xf]
        %v202 = vld [vmem:[%s197] sm:$0xff]
        %v203 = vld [vmem:[%s197 + $0x8] sm:$0xff]
        %v204 = vld [vmem:[%s197 + $0x10] sm:$0xff]
        %v205 = vld [vmem:[%s197 + $0x18] sm:$0xff]
        %v206 = vld [vmem:[%s197 + $0x20] sm:$0x33]
        %v207 = vld [vmem:[%s2] sm:$0xff]
        %209 = vset.pattern.permute.xlu0 0
        %210 = vperm.xlu0 %209, %v207
        %v211 = vpop.permute.xlu0 %210
        %v218 = vunpack.c.l.b16 %v202
        %v219 = vunpack.c.h.b16 %v202
        %v220 = vunpack.c.l.b16 %v203
        %v221 = vunpack.c.h.b16 %v203
        %v222 = vunpack.c.l.b16 %v204
        %v223 = vunpack.c.h.b16 %v204
        %v224 = vunpack.c.l.b16 %v205
        %v225 = vunpack.c.h.b16 %v205
        %v226 = vunpack.c.l.b16 %v206
        %v227 = vunpack.c.h.b16 %v206
        %v228 = vpack.c.b16 %v220, %v218
        %v229 = vpack.c.b16 %v221, %v219
        %v230 = vpack.c.b16 %v224, %v222
        %v231 = vpack.c.b16 %v225, %v223
        %v232 = vpack.c.b16 %v226, %v226
        %v233 = vpack.c.b16 %v227, %v227
        %vm238 = vcmask 293888
        %v240 = vsel %vm238, %v201, 0
        %vm242 = vcmask 1041408
        %v244 = vsel %vm242, %v232, 0
        %v247 = vsel %vm242, %v233, 0
        %249 = vmatpush.bf16.msra.mxu0 0
        %250 = vmatpush.bf16.msra.mxu0 0
        %251 = vmatpush.bf16.msra.mxu0 0
        %252 = vmatpush.bf16.msra.mxu0 0
        %253 = vmatpush.bf16.msra.mxu0 0
        %254 = vmatpush.bf16.msra.mxu0 %v244
        %255 = vmatpush.bf16.msra.mxu0 %v230
        %256 = vmatpush.bf16.msra.mxu0 %v228
        %257 = vmatmul.bf16.gmra.mxu0 %v240
        %v258 = vpop.f32.mrf.mxu0
        %v259 = vadd.f32 %v211, %v258
        %v260 = vpop.f32.mrf.mxu0
        %261 = vdwg.mxu0
        %262 = vmatpush.bf16.msra.mxu0 0
        %263 = vmatpush.bf16.msra.mxu0 0
        %264 = vmatpush.bf16.msra.mxu0 0
        %265 = vmatpush.bf16.msra.mxu0 0
        %266 = vmatpush.bf16.msra.mxu0 0
        %267 = vmatpush.bf16.msra.mxu0 %v247
        %268 = vmatpush.bf16.msra.mxu0 %v231
        %269 = vmatpush.bf16.msra.mxu0 %v229
        %270 = vmatmul.bf16.gmra.mxu0 %v240
        %v271 = vpop.f32.mrf.mxu0
        %v272 = vadd.f32 %v211, %v271
        %v273 = vpop.f32.mrf.mxu0
        %274 = vdwg.mxu0
        %275 = vst [vmem:[%s188] sm:$0xff] %v259
        %276 = vst [vmem:[%s188 + $0x8] sm:$0xff] %v272
        %s277 = sand.u32 %s109, 1
        %s278 = scalar_lea.sflag [#allocation3], %s277
        %s279 = sand.u32 %s109, 1
        %s280 = smul.addr %s279, 16
        %s281 = scalar_lea.vmem [#allocation2], %s280
        // Predicated region
        $region33: #{tpu_custom_call.1} parent=31 // pred_check
          %p282 = pneg %p119
        $region34: #{tpu_custom_call.1} parent=31 // pred_check_branch
          %284 = sbr.rel (%p282) target = $region36
        $region35: #{tpu_custom_call.1} parent=31 // pred_region
          %s285 = smul.u32 2, %s22
          %287 = vsyncadd %s278, 0
          %s288 = smul.addr %s21, 2
          %s289 = sadd.s32 %s285, %s288
          %s290 = smul.addr %s289, 8
          %s291 = scalar_lea.hbm %s3, %s290
          %s293 = sshll.u32 %s281, 4
          %s294 = int_to_ptr.vmem [resolvable:$true] %s293
          %s295 = sshll.u32 %s291, 4
          %s296 = int_to_ptr.hbm [resolvable:$true] %s295
          %298 = dma.vmem_to_hbm [thread:$0]  %s294, 256, %s296, %s278
        $region36: #{tpu_custom_call.1} parent=31 // pred_fallthru
          _
      $region32: #{tpu_custom_call.1} parent=5 // pred_fallthru
        _
      %p299 = scmp.le.s32.totalorder 2, %s12
      // Predicated region
      $region37: #{tpu_custom_call.1} parent=5 // pred_check
        %p300 = pneg %p299
      $region38: #{tpu_custom_call.1} parent=5 // pred_check_branch
        %302 = sbr.rel (%p300) target = $region40
      $region39: #{tpu_custom_call.1} parent=5 // pred_region
        %s303 = ssub.s32 %s12, 2
        // Predicated region
        $region41: #{tpu_custom_call.1} parent=39 // pred_check
          %p304 = pneg %p125
        $region42: #{tpu_custom_call.1} parent=39 // pred_check_branch
          %306 = sbr.rel (%p304) target = $region44
        $region43: #{tpu_custom_call.1} parent=39 // pred_region
          %s307 = sand.u32 %s110, 1
          %s308 = scalar_lea.sflag [#allocation3], %s307
          %s309 = sand.u32 %s110, 1
          %s310 = smul.addr %s309, 16
          %s311 = scalar_lea.vmem [#allocation2], %s310
          %313 = dma.done %s308, 256
        $region44: #{tpu_custom_call.1} parent=39 // pred_fallthru
          _
      $region40: #{tpu_custom_call.1} parent=5 // pred_fallthru
        _
    $region6: #{tpu_custom_call.1} parent=1 // loop_footer
      %s16 = sadd.s32 1, %s12
    $region7: #{tpu_custom_call.1} parent=1 // loop_footer_branch
      %11 = sbr.rel target = $region3
    $region8: #{tpu_custom_call.1} parent=1 // loop_exit
      _
    %314 = vsyncpa [#allocation3], 1
    %s315 = scalar_lea.sflag [#allocation3], 1
    %316 = vsyncpa %s315, 1

</llo_original>
